<compile_context>
chip_gen: v5e
topology: v5e:2x2
jax: 0.10.0
libtpu: 0.0.40
codegen_flags: <defaults>
</compile_context>

<pallas_src>
import jax
import jax.numpy as jnp
from jax import lax
from jax.experimental import pallas as pl
from jax.experimental.pallas import tpu as pltpu

_LANES = 128
_STATS = 8        # per-core partial: [n, mean_p, mean_y, M2_p, M2_y, C_py, l1_sum, pad]
_MAX_CORES = 2    # leading 'parallel' grid axis (v7x has 2 TCs; harmless elsewhere)


def _round_up(x: int, m: int) -> int:
    return (x + m - 1) // m * m


def _vmem_capacity_bytes(default: int = 64 * 1024 * 1024) -> int:
    try:
        info = pltpu.get_tpu_info()
        return int(getattr(info, "vmem_capacity_bytes", default))
    except Exception:
        return default


def _make_sme_partial_kernel(n: int, tile_rows: int, chunks_per_core: int,
                             num_chunks: int):
    chunk_elems = tile_rows * _LANES
    inv_chunk = 1.0 / float(chunk_elems)

    def kernel(mapped_ref, aligned_ref, y_ref, out_ref,
               nacc, mpacc, myacc, m2p, m2y, cpy, l1acc):
        c = pl.program_id(0)   # core (parallel)
        i = pl.program_id(1)   # chunk within this core (arbitrary / reduction)

        accs = (nacc, mpacc, myacc, m2p, m2y, cpy, l1acc)

        @pl.when(i == 0)
        def _init():
            for r in accs:
                r[...] = jnp.zeros_like(r)

        # Per-tile cast (inputs stream HBM->VMEM in their native dtype).
        p = mapped_ref[...].astype(jnp.float32)
        a = aligned_ref[...].astype(jnp.float32)
        y = y_ref[...].astype(jnp.float32)

        def _sum(x):
            return jnp.sum(x, keepdims=True)          # (1, 1)

        def chan_update(n_b, m_pb, m_yb, ss_p, ss_y, c_py, l1_c):
            # Chan / parallel moment combination of (running) + (this chunk).
            n_a = nacc[...]
            mu_p = mpacc[...]
            mu_y = myacc[...]
            n_ab = n_a + n_b
            inv_nab = 1.0 / jnp.maximum(n_ab, 1.0)     # safe for empty chunks
            dp = m_pb - mu_p
            dy = m_yb - mu_y
            w = n_a * n_b * inv_nab
            nacc[...] = n_ab
            mpacc[...] = mu_p + dp * n_b * inv_nab
            myacc[...] = mu_y + dy * n_b * inv_nab
            m2p[...] = m2p[...] + ss_p + dp * dp * w
            m2y[...] = m2y[...] + ss_y + dy * dy * w
            cpy[...] = cpy[...] + c_py + dp * dy * w
            l1acc[...] = l1acc[...] + l1_c

        # Logical chunk id (may exceed num_chunks-1 for the clamped spill chunk;
        # such chunks mask to empty below).  int32 flat indexing (N < 2**31).
        chunk_id = c * chunks_per_core + i
        chunk_start = chunk_id * chunk_elems
        is_full = (chunk_start + chunk_elems) <= n

        @pl.when(is_full)
        def _full_chunk():
            # Hot path: no masking at all (review item 1).
            s_p = _sum(p)
            s_y = _sum(y)
            l1_c = _sum(jnp.abs(a - y))
            m_pb = s_p * jnp.float32(inv_chunk)        # compile-time 1/chunk
            m_yb = s_y * jnp.float32(inv_chunk)
            cp = p - m_pb
            cy = y - m_yb
            chan_update(jnp.float32(float(chunk_elems)), m_pb, m_yb,
                        _sum(cp * cp), _sum(cy * cy), _sum(cp * cy), l1_c)

        @pl.when(jnp.logical_not(is_full))
        def _tail_chunk():
            # Ragged tail (and clamped spill chunks): mask by global flat index.
            flat = (chunk_start
                    + lax.broadcasted_iota(jnp.int32, (tile_rows, _LANES), 0) * _LANES
                    + lax.broadcasted_iota(jnp.int32, (tile_rows, _LANES), 1))
            valid = flat < n
            zero = jnp.float32(0.0)
            n_b = jnp.clip(n - chunk_start, 0, chunk_elems).astype(jnp.float32)
            inv_nb = 1.0 / jnp.maximum(n_b, 1.0)
            s_p = _sum(jnp.where(valid, p, zero))
            s_y = _sum(jnp.where(valid, y, zero))
            l1_c = _sum(jnp.where(valid, jnp.abs(a - y), zero))
            m_pb = s_p * inv_nb
            m_yb = s_y * inv_nb
            cp = jnp.where(valid, p - m_pb, zero)
            cy = jnp.where(valid, y - m_yb, zero)
            chan_update(n_b, m_pb, m_yb,
                        _sum(cp * cp), _sum(cy * cy), _sum(cp * cy), l1_c)

        @pl.when(i == chunks_per_core - 1)
        def _finalize():
            # Write the 7 partial stats into lanes 0..6 of row 0 of this core's
            # (8,128) output block (single unmasked full-tile store).
            srow = lax.broadcasted_iota(jnp.int32, (_STATS, _LANES), 0)
            lane = lax.broadcasted_iota(jnp.int32, (_STATS, _LANES), 1)
            tile = jnp.zeros((_STATS, _LANES), jnp.float32)
            for k, r in enumerate(accs):
                tile = jnp.where((srow == 0) & (lane == k), r[...], tile)
            out_ref[...] = tile

    return kernel


def sme_loss(mapped_score, aligned_score, y, *, scale: float, tile_rows_cap=None):
    """mapped_score, aligned_score, y: (N, 1) arrays (PyTorch column vectors)."""
    n = int(mapped_score.shape[0])
    assert n > 1, "loss_accuracy requires batch size > 1"

    padded = _round_up(n, _LANES)
    assert padded < 2 ** 31, "int32 flat indexing limit"
    rows = padded // _LANES

    # Generation-aware tile sizing: bigger row tiles on 128 MiB VMEM parts
    # (v5e/v6e), conservative on 64 MiB v7x / unknown hardware.
    vmem_cap = _vmem_capacity_bytes()
    if tile_rows_cap is None:
        tile_rows_cap = 8192 if vmem_cap >= 100 * 1024 * 1024 else 4096
    tile_rows_cap = _round_up(int(tile_rows_cap), 8)
    # tile_rows is a multiple of 8, or equals the full row extent -> legal block.
    tile_rows = min(tile_rows_cap, rows)

    num_chunks = pl.cdiv(rows, tile_rows)
    num_cores = min(_MAX_CORES, num_chunks)
    chunks_per_core = pl.cdiv(num_chunks, num_cores)

    pad = padded - n

    def to_slab(x):
        flat = x.reshape(-1)          # keep input dtype; cast happens per tile
        if pad:
            # TODO(synk): copy-free tail handling would avoid this pad copy.
            flat = jnp.pad(flat, (0, pad))
        return flat.reshape(rows, _LANES)

    p_slab = to_slab(mapped_score)
    a_slab = to_slab(aligned_score)
    y_slab = to_slab(y)

    vmem_limit = max(32 * 1024 * 1024, vmem_cap - (16 << 20))

    kernel = _make_sme_partial_kernel(n, tile_rows, chunks_per_core, num_chunks)

    def in_map(c, i):
        # Clamp so cores whose last logical chunk spills past the array re-read
        # the final block; the spill chunk masks itself to empty in-kernel.
        return (jnp.minimum(c * chunks_per_core + i, num_chunks - 1), 0)

    partials = pl.pallas_call(
        kernel,
        out_shape=jax.ShapeDtypeStruct((num_cores * _STATS, _LANES), jnp.float32),
        grid=(num_cores, chunks_per_core),
        in_specs=[pl.BlockSpec((tile_rows, _LANES), in_map)] * 3,
        out_specs=pl.BlockSpec((_STATS, _LANES), lambda c, i: (c, 0)),
        scratch_shapes=[pltpu.VMEM((1, 1), jnp.float32)] * 7,
        compiler_params=pltpu.CompilerParams(
            dimension_semantics=("parallel", "arbitrary"),
            vmem_limit_bytes=int(vmem_limit)),
    )(p_slab, a_slab, y_slab)

    # ---- tiny wrapper epilogue: Chan-merge per-core partials, finish loss ----
    def chan_merge(s0, s1):
        n0, mp0, my0, p0, y0, c0, l0 = s0
        n1, mp1, my1, p1, y1, c1, l1 = s1
        nt = n0 + n1
        inv = 1.0 / jnp.maximum(nt, 1.0)
        dp = mp1 - mp0
        dy = my1 - my0
        w = n0 * n1 * inv
        return (nt,
                mp0 + dp * n1 * inv,
                my0 + dy * n1 * inv,
                p0 + p1 + dp * dp * w,
                y0 + y1 + dy * dy * w,
                c0 + c1 + dp * dy * w,
                l0 + l1)

    stats = None
    for c in range(num_cores):
        row = partials[c * _STATS, :7]
        cur = tuple(row[k] for k in range(7))
        stats = cur if stats is None else chan_merge(stats, cur)

    _, _, _, ss_p, ss_y, c_py, l1_sum = stats
    eps = jnp.float32(1e-8)
    denom = jnp.maximum(jnp.sqrt(ss_p), eps) * jnp.maximum(jnp.sqrt(ss_y), eps)
    plcc_loss = (jnp.float32(1.0) - c_py / denom) * jnp.float32(0.5)
    l1_loss = l1_sum / jnp.float32(float(n) * float(scale))

    # TODO(synk): 'srcc' term needs torchsort.soft_rank (differentiable ranking)
    # and 'vmaf' term needs a host-side pandas dataframe lookup; neither has a
    # Pallas equivalent, so they are omitted here.
    return plcc_loss + l1_loss


def sme_loss_reference(mapped_score, aligned_score, y, *, scale: float):
    """Pure-JAX reference mirroring the PyTorch forward ('plcc' + 'l1')."""
    p = mapped_score.reshape(-1).astype(jnp.float32)
    a = aligned_score.reshape(-1).astype(jnp.float32)
    t = y.reshape(-1).astype(jnp.float32)
    cp = p - jnp.mean(p)
    cy = t - jnp.mean(t)
    eps = 1e-8
    cos = jnp.sum(cp * cy) / (
        jnp.maximum(jnp.linalg.norm(cp), eps) * jnp.maximum(jnp.linalg.norm(cy), eps)
    )
    plcc = (1.0 - cos) / 2.0
    l1 = jnp.mean(jnp.abs(a - t)) / scale
    return plcc + l1


if __name__ == "__main__":
    key = jax.random.PRNGKey(0)
    k1, k2, k3, k4 = jax.random.split(key, 4)

    # --- primary small test (matches PyTorch column-vector shapes) -----------
    N = 8
    scale = 5.0
    relative_score = jax.random.normal(k1, (N, 1), dtype=jnp.float32)  # srcc term unused
    mapped_score = jax.random.normal(k2, (N, 1), dtype=jnp.float32) * 2.0 + 30.0
    aligned_score = jax.random.normal(k3, (N, 1), dtype=jnp.float32) * 2.0 + 30.0
    y_true = jax.random.normal(k4, (N, 1), dtype=jnp.float32) * 2.0 + 30.0

    loss = sme_loss(mapped_score, aligned_score, y_true, scale=scale)
    loss = jax.block_until_ready(loss)
    ref = sme_loss_reference(mapped_score, aligned_score, y_true, scale=scale)
    assert jnp.allclose(loss, ref, atol=1e-4, rtol=1e-4), (loss, ref)

    # --- secondary check: exercises multi-chunk streaming, both cores, the
    #     ragged-tail mask and the clamped spill chunk (tiny forced tiles) -----
    N2 = 3000
    k5, k6, k7 = jax.random.split(k1, 3)
    mapped2 = jax.random.normal(k5, (N2, 1), dtype=jnp.float32) * 2.0 + 30.0
    aligned2 = jax.random.normal(k6, (N2, 1), dtype=jnp.float32) * 2.0 + 30.0
    y2 = jax.random.normal(k7, (N2, 1), dtype=jnp.float32) * 2.0 + 30.0
    loss2 = sme_loss(mapped2, aligned2, y2, scale=scale, tile_rows_cap=8)
    loss2 = jax.block_until_ready(loss2)
    ref2 = sme_loss_reference(mapped2, aligned2, y2, scale=scale)
    assert jnp.allclose(loss2, ref2, atol=1e-4, rtol=1e-4), (loss2, ref2)

    print("KERNEL_OK")
</pallas_src>

<mosaic_0001>
module attributes {stable_mosaic.version = 11 : i64} {
  func.func @kernel(%arg0: i32, %arg1: i32, %arg2: memref<1x128xf32, #tpu.memory_space<vmem>>, %arg3: memref<1x128xf32, #tpu.memory_space<vmem>>, %arg4: memref<1x128xf32, #tpu.memory_space<vmem>>, %arg5: memref<8x128xf32, #tpu.memory_space<vmem>>, %arg6: memref<1x1xf32, #tpu.memory_space<vmem>>, %arg7: memref<1x1xf32, #tpu.memory_space<vmem>>, %arg8: memref<1x1xf32, #tpu.memory_space<vmem>>, %arg9: memref<1x1xf32, #tpu.memory_space<vmem>>, %arg10: memref<1x1xf32, #tpu.memory_space<vmem>>, %arg11: memref<1x1xf32, #tpu.memory_space<vmem>>, %arg12: memref<1x1xf32, #tpu.memory_space<vmem>>) attributes {dimension_semantics = [#tpu.dimension_semantics<parallel>, #tpu.dimension_semantics<arbitrary>], iteration_bounds = array<i64: 1, 1>, scalar_prefetch = 0 : i64, scratch_operands = 7 : i64, tpu.core_type = #tpu.core_type<tc>, window_params = [{transform_indices = @transform_0, window_bounds = array<i64: 1, 128>}, {transform_indices = @transform_1, window_bounds = array<i64: 1, 128>}, {transform_indices = @transform_2, window_bounds = array<i64: 1, 128>}, {transform_indices = @transform_3, window_bounds = array<i64: 8, 128>}]} {
    %c0_i32 = arith.constant 0 : i32
    %0 = arith.cmpi eq, %arg1, %c0_i32 : i32
    %1 = arith.extui %0 : i1 to i32
    %c0_i32_0 = arith.constant 0 : i32
    %2 = arith.cmpi ne, %1, %c0_i32_0 : i32
    scf.if %2 {
      %cst = arith.constant 0.000000e+00 : f32
      %19 = vector.broadcast %cst : f32 to vector<1x1xf32>
      %c0_11 = arith.constant 0 : index
      %c0_12 = arith.constant 0 : index
      %20 = vector.load %arg6[%c0_11, %c0_12] : memref<1x1xf32, #tpu.memory_space<vmem>>, vector<1x1xf32>
      tpu.vector_store %arg6[%c0_11, %c0_12], %19 {strides = array<i32>} : memref<1x1xf32, #tpu.memory_space<vmem>>, vector<1x1xf32>,
      %cst_13 = arith.constant 0.000000e+00 : f32
      %21 = vector.broadcast %cst_13 : f32 to vector<1x1xf32>
      %c0_14 = arith.constant 0 : index
      %c0_15 = arith.constant 0 : index
      %22 = vector.load %arg7[%c0_14, %c0_15] : memref<1x1xf32, #tpu.memory_space<vmem>>, vector<1x1xf32>
      tpu.vector_store %arg7[%c0_14, %c0_15], %21 {strides = array<i32>} : memref<1x1xf32, #tpu.memory_space<vmem>>, vector<1x1xf32>,
      %cst_16 = arith.constant 0.000000e+00 : f32
      %23 = vector.broadcast %cst_16 : f32 to vector<1x1xf32>
      %c0_17 = arith.constant 0 : index
      %c0_18 = arith.constant 0 : index
      %24 = vector.load %arg8[%c0_17, %c0_18] : memref<1x1xf32, #tpu.memory_space<vmem>>, vector<1x1xf32>
      tpu.vector_store %arg8[%c0_17, %c0_18], %23 {strides = array<i32>} : memref<1x1xf32, #tpu.memory_space<vmem>>, vector<1x1xf32>,
      %cst_19 = arith.constant 0.000000e+00 : f32
      %25 = vector.broadcast %cst_19 : f32 to vector<1x1xf32>
      %c0_20 = arith.constant 0 : index
      %c0_21 = arith.constant 0 : index
      %26 = vector.load %arg9[%c0_20, %c0_21] : memref<1x1xf32, #tpu.memory_space<vmem>>, vector<1x1xf32>
      tpu.vector_store %arg9[%c0_20, %c0_21], %25 {strides = array<i32>} : memref<1x1xf32, #tpu.memory_space<vmem>>, vector<1x1xf32>,
      %cst_22 = arith.constant 0.000000e+00 : f32
      %27 = vector.broadcast %cst_22 : f32 to vector<1x1xf32>
      %c0_23 = arith.constant 0 : index
      %c0_24 = arith.constant 0 : index
      %28 = vector.load %arg10[%c0_23, %c0_24] : memref<1x1xf32, #tpu.memory_space<vmem>>, vector<1x1xf32>
      tpu.vector_store %arg10[%c0_23, %c0_24], %27 {strides = array<i32>} : memref<1x1xf32, #tpu.memory_space<vmem>>, vector<1x1xf32>,
      %cst_25 = arith.constant 0.000000e+00 : f32
      %29 = vector.broadcast %cst_25 : f32 to vector<1x1xf32>
      %c0_26 = arith.constant 0 : index
      %c0_27 = arith.constant 0 : index
      %30 = vector.load %arg11[%c0_26, %c0_27] : memref<1x1xf32, #tpu.memory_space<vmem>>, vector<1x1xf32>
      tpu.vector_store %arg11[%c0_26, %c0_27], %29 {strides = array<i32>} : memref<1x1xf32, #tpu.memory_space<vmem>>, vector<1x1xf32>,
      %cst_28 = arith.constant 0.000000e+00 : f32
      %31 = vector.broadcast %cst_28 : f32 to vector<1x1xf32>
      %c0_29 = arith.constant 0 : index
      %c0_30 = arith.constant 0 : index
      %32 = vector.load %arg12[%c0_29, %c0_30] : memref<1x1xf32, #tpu.memory_space<vmem>>, vector<1x1xf32>
      tpu.vector_store %arg12[%c0_29, %c0_30], %31 {strides = array<i32>} : memref<1x1xf32, #tpu.memory_space<vmem>>, vector<1x1xf32>,
    } else {
    }
    %c0 = arith.constant 0 : index
    %c0_1 = arith.constant 0 : index
    %3 = vector.load %arg2[%c0, %c0_1] : memref<1x128xf32, #tpu.memory_space<vmem>>, vector<1x128xf32>
    %c0_2 = arith.constant 0 : index
    %c0_3 = arith.constant 0 : index
    %4 = vector.load %arg3[%c0_2, %c0_3] : memref<1x128xf32, #tpu.memory_space<vmem>>, vector<1x128xf32>
    %c0_4 = arith.constant 0 : index
    %c0_5 = arith.constant 0 : index
    %5 = vector.load %arg4[%c0_4, %c0_5] : memref<1x128xf32, #tpu.memory_space<vmem>>, vector<1x128xf32>
    %c1_i32 = arith.constant 1 : i32
    %6 = arith.muli %arg0, %c1_i32 : i32
    %7 = arith.addi %6, %arg1 : i32
    %c128_i32 = arith.constant 128 : i32
    %8 = arith.muli %7, %c128_i32 : i32
    %c128_i32_6 = arith.constant 128 : i32
    %9 = arith.addi %8, %c128_i32_6 : i32
    %c8_i32 = arith.constant 8 : i32
    %10 = arith.cmpi sle, %9, %c8_i32 : i32
    %11 = arith.extui %10 : i1 to i32
    %c0_i32_7 = arith.constant 0 : i32
    %12 = arith.cmpi ne, %11, %c0_i32_7 : i32
    scf.if %12 {
      %19 = vector.shape_cast %3 : vector<1x128xf32> to vector<1x1x128xf32>
      %cst = arith.constant dense<0.000000e+00> : vector<1xf32>
      %20 = vector.multi_reduction <add>, %19, %cst [1, 2] : vector<1x1x128xf32> to vector<1xf32>
      %21 = vector.shape_cast %20 : vector<1xf32> to vector<1x1x1xf32>
      %22 = vector.extract %21[0, 0, 0] : f32 from vector<1x1x1xf32>
      %23 = vector.broadcast %22 : f32 to vector<1x1xf32>
      %24 = vector.shape_cast %5 : vector<1x128xf32> to vector<1x1x128xf32>
      %cst_11 = arith.constant dense<0.000000e+00> : vector<1xf32>
      %25 = vector.multi_reduction <add>, %24, %cst_11 [1, 2] : vector<1x1x128xf32> to vector<1xf32>
      %26 = vector.shape_cast %25 : vector<1xf32> to vector<1x1x1xf32>
      %27 = vector.extract %26[0, 0, 0] : f32 from vector<1x1x1xf32>
      %28 = vector.broadcast %27 : f32 to vector<1x1xf32>
      %29 = arith.subf %4, %5 : vector<1x128xf32>
      %30 = math.absf %29 : vector<1x128xf32>
      %31 = vector.shape_cast %30 : vector<1x128xf32> to vector<1x1x128xf32>
      %cst_12 = arith.constant dense<0.000000e+00> : vector<1xf32>
      %32 = vector.multi_reduction <add>, %31, %cst_12 [1, 2] : vector<1x1x128xf32> to vector<1xf32>
      %33 = vector.shape_cast %32 : vector<1xf32> to vector<1x1x1xf32>
      %34 = vector.extract %33[0, 0, 0] : f32 from vector<1x1x1xf32>
      %35 = vector.broadcast %34 : f32 to vector<1x1xf32>
      %cst_13 = arith.constant 7.812500e-03 : f32
      %36 = vector.broadcast %cst_13 : f32 to vector<1x1xf32>
      %37 = arith.mulf %23, %36 : vector<1x1xf32>
      %cst_14 = arith.constant 7.812500e-03 : f32
      %38 = vector.broadcast %cst_14 : f32 to vector<1x1xf32>
      %39 = arith.mulf %28, %38 : vector<1x1xf32>
      %40 = vector.broadcast %37 : vector<1x1xf32> to vector<1x128xf32>
      %41 = arith.subf %3, %40 : vector<1x128xf32>
      %42 = vector.broadcast %39 : vector<1x1xf32> to vector<1x128xf32>
      %43 = arith.subf %5, %42 : vector<1x128xf32>
      %44 = arith.mulf %41, %41 : vector<1x128xf32>
      %45 = vector.shape_cast %44 : vector<1x128xf32> to vector<1x1x128xf32>
      %cst_15 = arith.constant dense<0.000000e+00> : vector<1xf32>
      %46 = vector.multi_reduction <add>, %45, %cst_15 [1, 2] : vector<1x1x128xf32> to vector<1xf32>
      %47 = vector.shape_cast %46 : vector<1xf32> to vector<1x1x1xf32>
      %48 = vector.extract %47[0, 0, 0] : f32 from vector<1x1x1xf32>
      %49 = vector.broadcast %48 : f32 to vector<1x1xf32>
      %50 = arith.mulf %43, %43 : vector<1x128xf32>
      %51 = vector.shape_cast %50 : vector<1x128xf32> to vector<1x1x128xf32>
      %cst_16 = arith.constant dense<0.000000e+00> : vector<1xf32>
      %52 = vector.multi_reduction <add>, %51, %cst_16 [1, 2] : vector<1x1x128xf32> to vector<1xf32>
      %53 = vector.shape_cast %52 : vector<1xf32> to vector<1x1x1xf32>
      %54 = vector.extract %53[0, 0, 0] : f32 from vector<1x1x1xf32>
      %55 = vector.broadcast %54 : f32 to vector<1x1xf32>
      %56 = arith.mulf %41, %43 : vector<1x128xf32>
      %57 = vector.shape_cast %56 : vector<1x128xf32> to vector<1x1x128xf32>
      %cst_17 = arith.constant dense<0.000000e+00> : vector<1xf32>
      %58 = vector.multi_reduction <add>, %57, %cst_17 [1, 2] : vector<1x1x128xf32> to vector<1xf32>
      %59 = vector.shape_cast %58 : vector<1xf32> to vector<1x1x1xf32>
      %60 = vector.extract %59[0, 0, 0] : f32 from vector<1x1x1xf32>
      %61 = vector.broadcast %60 : f32 to vector<1x1xf32>
      %c0_18 = arith.constant 0 : index
      %c0_19 = arith.constant 0 : index
      %62 = vector.load %arg6[%c0_18, %c0_19] : memref<1x1xf32, #tpu.memory_space<vmem>>, vector<1x1xf32>
      %c0_20 = arith.constant 0 : index
      %c0_21 = arith.constant 0 : index
      %63 = vector.load %arg7[%c0_20, %c0_21] : memref<1x1xf32, #tpu.memory_space<vmem>>, vector<1x1xf32>
      %c0_22 = arith.constant 0 : index
      %c0_23 = arith.constant 0 : index
      %64 = vector.load %arg8[%c0_22, %c0_23] : memref<1x1xf32, #tpu.memory_space<vmem>>, vector<1x1xf32>
      %cst_24 = arith.constant 1.280000e+02 : f32
      %65 = vector.broadcast %cst_24 : f32 to vector<1x1xf32>
      %66 = arith.addf %62, %65 : vector<1x1xf32>
      %cst_25 = arith.constant 1.000000e+00 : f32
      %67 = vector.broadcast %cst_25 : f32 to vector<1x1xf32>
      %68 = arith.maximumf %66, %67 : vector<1x1xf32>
      %cst_26 = arith.constant 1.000000e+00 : f32
      %69 = vector.broadcast %cst_26 : f32 to vector<1x1xf32>
      %70 = arith.divf %69, %68 : vector<1x1xf32>
      %71 = arith.subf %37, %63 : vector<1x1xf32>
      %72 = arith.subf %39, %64 : vector<1x1xf32>
      %cst_27 = arith.constant 1.280000e+02 : f32
      %73 = vector.broadcast %cst_27 : f32 to vector<1x1xf32>
      %74 = arith.mulf %62, %73 : vector<1x1xf32>
      %75 = arith.mulf %74, %70 : vector<1x1xf32>
      %c0_28 = arith.constant 0 : index
      %c0_29 = arith.constant 0 : index
      %76 = vector.load %arg6[%c0_28, %c0_29] : memref<1x1xf32, #tpu.memory_space<vmem>>, vector<1x1xf32>
      tpu.vector_store %arg6[%c0_28, %c0_29], %66 {strides = array<i32>} : memref<1x1xf32, #tpu.memory_space<vmem>>, vector<1x1xf32>,
      %cst_30 = arith.constant 1.280000e+02 : f32
      %77 = vector.broadcast %cst_30 : f32 to vector<1x1xf32>
      %78 = arith.mulf %71, %77 : vector<1x1xf32>
      %79 = arith.mulf %78, %70 : vector<1x1xf32>
      %80 = arith.addf %63, %79 : vector<1x1xf32>
      %c0_31 = arith.constant 0 : index
      %c0_32 = arith.constant 0 : index
      %81 = vector.load %arg7[%c0_31, %c0_32] : memref<1x1xf32, #tpu.memory_space<vmem>>, vector<1x1xf32>
      tpu.vector_store %arg7[%c0_31, %c0_32], %80 {strides = array<i32>} : memref<1x1xf32, #tpu.memory_space<vmem>>, vector<1x1xf32>,
      %cst_33 = arith.constant 1.280000e+02 : f32
      %82 = vector.broadcast %cst_33 : f32 to vector<1x1xf32>
      %83 = arith.mulf %72, %82 : vector<1x1xf32>
      %84 = arith.mulf %83, %70 : vector<1x1xf32>
      %85 = arith.addf %64, %84 : vector<1x1xf32>
      %c0_34 = arith.constant 0 : index
      %c0_35 = arith.constant 0 : index
      %86 = vector.load %arg8[%c0_34, %c0_35] : memref<1x1xf32, #tpu.memory_space<vmem>>, vector<1x1xf32>
      tpu.vector_store %arg8[%c0_34, %c0_35], %85 {strides = array<i32>} : memref<1x1xf32, #tpu.memory_space<vmem>>, vector<1x1xf32>,
      %c0_36 = arith.constant 0 : index
      %c0_37 = arith.constant 0 : index
      %87 = vector.load %arg9[%c0_36, %c0_37] : memref<1x1xf32, #tpu.memory_space<vmem>>, vector<1x1xf32>
      %88 = arith.addf %87, %49 : vector<1x1xf32>
      %89 = arith.mulf %71, %71 : vector<1x1xf32>
      %90 = arith.mulf %89, %75 : vector<1x1xf32>
      %91 = arith.addf %88, %90 : vector<1x1xf32>
      %c0_38 = arith.constant 0 : index
      %c0_39 = arith.constant 0 : index
      %92 = vector.load %arg9[%c0_38, %c0_39] : memref<1x1xf32, #tpu.memory_space<vmem>>, vector<1x1xf32>
      tpu.vector_store %arg9[%c0_38, %c0_39], %91 {strides = array<i32>} : memref<1x1xf32, #tpu.memory_space<vmem>>, vector<1x1xf32>,
      %c0_40 = arith.constant 0 : index
      %c0_41 = arith.constant 0 : index
      %93 = vector.load %arg10[%c0_40, %c0_41] : memref<1x1xf32, #tpu.memory_space<vmem>>, vector<1x1xf32>
      %94 = arith.addf %93, %55 : vector<1x1xf32>
      %95 = arith.mulf %72, %72 : vector<1x1xf32>
      %96 = arith.mulf %95, %75 : vector<1x1xf32>
      %97 = arith.addf %94, %96 : vector<1x1xf32>
      %c0_42 = arith.constant 0 : index
      %c0_43 = arith.constant 0 : index
      %98 = vector.load %arg10[%c0_42, %c0_43] : memref<1x1xf32, #tpu.memory_space<vmem>>, vector<1x1xf32>
      tpu.vector_store %arg10[%c0_42, %c0_43], %97 {strides = array<i32>} : memref<1x1xf32, #tpu.memory_space<vmem>>, vector<1x1xf32>,
      %c0_44 = arith.constant 0 : index
      %c0_45 = arith.constant 0 : index
      %99 = vector.load %arg11[%c0_44, %c0_45] : memref<1x1xf32, #tpu.memory_space<vmem>>, vector<1x1xf32>
      %100 = arith.addf %99, %61 : vector<1x1xf32>
      %101 = arith.mulf %71, %72 : vector<1x1xf32>
      %102 = arith.mulf %101, %75 : vector<1x1xf32>
      %103 = arith.addf %100, %102 : vector<1x1xf32>
      %c0_46 = arith.constant 0 : index
      %c0_47 = arith.constant 0 : index
      %104 = vector.load %arg11[%c0_46, %c0_47] : memref<1x1xf32, #tpu.memory_space<vmem>>, vector<1x1xf32>
      tpu.vector_store %arg11[%c0_46, %c0_47], %103 {strides = array<i32>} : memref<1x1xf32, #tpu.memory_space<vmem>>, vector<1x1xf32>,
      %c0_48 = arith.constant 0 : index
      %c0_49 = arith.constant 0 : index
      %105 = vector.load %arg12[%c0_48, %c0_49] : memref<1x1xf32, #tpu.memory_space<vmem>>, vector<1x1xf32>
      %106 = arith.addf %105, %35 : vector<1x1xf32>
      %c0_50 = arith.constant 0 : index
      %c0_51 = arith.constant 0 : index
      %107 = vector.load %arg12[%c0_50, %c0_51] : memref<1x1xf32, #tpu.memory_space<vmem>>, vector<1x1xf32>
      tpu.vector_store %arg12[%c0_50, %c0_51], %106 {strides = array<i32>} : memref<1x1xf32, #tpu.memory_space<vmem>>, vector<1x1xf32>,
    } else {
    }
    %true = arith.constant true
    %13 = arith.xori %10, %true : i1
    %14 = arith.extui %13 : i1 to i32
    %c0_i32_8 = arith.constant 0 : i32
    %15 = arith.cmpi ne, %14, %c0_i32_8 : i32
    scf.if %15 {
      %19 = tpu.iota {dimensions = array<i32: 0>} : vector<1x128xi32>
      %c128_i32_11 = arith.constant 128 : i32
      %20 = vector.broadcast %c128_i32_11 : i32 to vector<1x128xi32>
      %21 = arith.muli %19, %20 : vector<1x128xi32>
      %22 = vector.broadcast %8 : i32 to vector<1x128xi32>
      %23 = arith.addi %22, %21 : vector<1x128xi32>
      %24 = tpu.iota {dimensions = array<i32: 1>} : vector<1x128xi32>
      %25 = arith.addi %23, %24 : vector<1x128xi32>
      %c8_i32_12 = arith.constant 8 : i32
      %26 = vector.broadcast %c8_i32_12 : i32 to vector<1x128xi32>
      %27 = arith.cmpi slt, %25, %26 : vector<1x128xi32>
      %c8_i32_13 = arith.constant 8 : i32
      %28 = arith.subi %c8_i32_13, %8 : i32
      %c0_i32_14 = arith.constant 0 : i32
      %c128_i32_15 = arith.constant 128 : i32
      %29 = arith.maxsi %c0_i32_14, %28 : i32
      %30 = arith.minsi %c128_i32_15, %29 : i32
      %31 = arith.sitofp %30 : i32 to f32
      %cst = arith.constant 1.000000e+00 : f32
      %32 = arith.maximumf %31, %cst : f32
      %cst_16 = arith.constant 1.000000e+00 : f32
      %33 = arith.divf %cst_16, %32 : f32
      %cst_17 = arith.constant 0.000000e+00 : f32
      %34 = vector.broadcast %cst_17 : f32 to vector<1x128xf32>
      %35 = arith.select %27, %3, %34 : vector<1x128xi1>, vector<1x128xf32>
      %36 = vector.shape_cast %35 : vector<1x128xf32> to vector<1x1x128xf32>
      %cst_18 = arith.constant dense<0.000000e+00> : vector<1xf32>
      %37 = vector.multi_reduction <add>, %36, %cst_18 [1, 2] : vector<1x1x128xf32> to vector<1xf32>
      %38 = vector.shape_cast %37 : vector<1xf32> to vector<1x1x1xf32>
      %39 = vector.extract %38[0, 0, 0] : f32 from vector<1x1x1xf32>
      %40 = vector.broadcast %39 : f32 to vector<1x1xf32>
      %cst_19 = arith.constant 0.000000e+00 : f32
      %41 = vector.broadcast %cst_19 : f32 to vector<1x128xf32>
      %42 = arith.select %27, %5, %41 : vector<1x128xi1>, vector<1x128xf32>
      %43 = vector.shape_cast %42 : vector<1x128xf32> to vector<1x1x128xf32>
      %cst_20 = arith.constant dense<0.000000e+00> : vector<1xf32>
      %44 = vector.multi_reduction <add>, %43, %cst_20 [1, 2] : vector<1x1x128xf32> to vector<1xf32>
      %45 = vector.shape_cast %44 : vector<1xf32> to vector<1x1x1xf32>
      %46 = vector.extract %45[0, 0, 0] : f32 from vector<1x1x1xf32>
      %47 = vector.broadcast %46 : f32 to vector<1x1xf32>
      %48 = arith.subf %4, %5 : vector<1x128xf32>
      %49 = math.absf %48 : vector<1x128xf32>
      %cst_21 = arith.constant 0.000000e+00 : f32
      %50 = vector.broadcast %cst_21 : f32 to vector<1x128xf32>
      %51 = arith.select %27, %49, %50 : vector<1x128xi1>, vector<1x128xf32>
      %52 = vector.shape_cast %51 : vector<1x128xf32> to vector<1x1x128xf32>
      %cst_22 = arith.constant dense<0.000000e+00> : vector<1xf32>
      %53 = vector.multi_reduction <add>, %52, %cst_22 [1, 2] : vector<1x1x128xf32> to vector<1xf32>
      %54 = vector.shape_cast %53 : vector<1xf32> to vector<1x1x1xf32>
      %55 = vector.extract %54[0, 0, 0] : f32 from vector<1x1x1xf32>
      %56 = vector.broadcast %55 : f32 to vector<1x1xf32>
      %57 = vector.broadcast %33 : f32 to vector<1x1xf32>
      %58 = arith.mulf %40, %57 : vector<1x1xf32>
      %59 = vector.broadcast %33 : f32 to vector<1x1xf32>
      %60 = arith.mulf %47, %59 : vector<1x1xf32>
      %61 = vector.broadcast %58 : vector<1x1xf32> to vector<1x128xf32>
      %62 = arith.subf %3, %61 : vector<1x128xf32>
      %cst_23 = arith.constant 0.000000e+00 : f32
      %63 = vector.broadcast %cst_23 : f32 to vector<1x128xf32>
      %64 = arith.select %27, %62, %63 : vector<1x128xi1>, vector<1x128xf32>
      %65 = vector.broadcast %60 : vector<1x1xf32> to vector<1x128xf32>
      %66 = arith.subf %5, %65 : vector<1x128xf32>
      %cst_24 = arith.constant 0.000000e+00 : f32
      %67 = vector.broadcast %cst_24 : f32 to vector<1x128xf32>
      %68 = arith.select %27, %66, %67 : vector<1x128xi1>, vector<1x128xf32>
      %69 = arith.mulf %64, %64 : vector<1x128xf32>
      %70 = vector.shape_cast %69 : vector<1x128xf32> to vector<1x1x128xf32>
      %cst_25 = arith.constant dense<0.000000e+00> : vector<1xf32>
      %71 = vector.multi_reduction <add>, %70, %cst_25 [1, 2] : vector<1x1x128xf32> to vector<1xf32>
      %72 = vector.shape_cast %71 : vector<1xf32> to vector<1x1x1xf32>
      %73 = vector.extract %72[0, 0, 0] : f32 from vector<1x1x1xf32>
      %74 = vector.broadcast %73 : f32 to vector<1x1xf32>
      %75 = arith.mulf %68, %68 : vector<1x128xf32>
      %76 = vector.shape_cast %75 : vector<1x128xf32> to vector<1x1x128xf32>
      %cst_26 = arith.constant dense<0.000000e+00> : vector<1xf32>
      %77 = vector.multi_reduction <add>, %76, %cst_26 [1, 2] : vector<1x1x128xf32> to vector<1xf32>
      %78 = vector.shape_cast %77 : vector<1xf32> to vector<1x1x1xf32>
      %79 = vector.extract %78[0, 0, 0] : f32 from vector<1x1x1xf32>
      %80 = vector.broadcast %79 : f32 to vector<1x1xf32>
      %81 = arith.mulf %64, %68 : vector<1x128xf32>
      %82 = vector.shape_cast %81 : vector<1x128xf32> to vector<1x1x128xf32>
      %cst_27 = arith.constant dense<0.000000e+00> : vector<1xf32>
      %83 = vector.multi_reduction <add>, %82, %cst_27 [1, 2] : vector<1x1x128xf32> to vector<1xf32>
      %84 = vector.shape_cast %83 : vector<1xf32> to vector<1x1x1xf32>
      %85 = vector.extract %84[0, 0, 0] : f32 from vector<1x1x1xf32>
      %86 = vector.broadcast %85 : f32 to vector<1x1xf32>
      %c0_28 = arith.constant 0 : index
      %c0_29 = arith.constant 0 : index
      %87 = vector.load %arg6[%c0_28, %c0_29] : memref<1x1xf32, #tpu.memory_space<vmem>>, vector<1x1xf32>
      %c0_30 = arith.constant 0 : index
      %c0_31 = arith.constant 0 : index
      %88 = vector.load %arg7[%c0_30, %c0_31] : memref<1x1xf32, #tpu.memory_space<vmem>>, vector<1x1xf32>
      %c0_32 = arith.constant 0 : index
      %c0_33 = arith.constant 0 : index
      %89 = vector.load %arg8[%c0_32, %c0_33] : memref<1x1xf32, #tpu.memory_space<vmem>>, vector<1x1xf32>
      %90 = vector.broadcast %31 : f32 to vector<1x1xf32>
      %91 = arith.addf %87, %90 : vector<1x1xf32>
      %cst_34 = arith.constant 1.000000e+00 : f32
      %92 = vector.broadcast %cst_34 : f32 to vector<1x1xf32>
      %93 = arith.maximumf %91, %92 : vector<1x1xf32>
      %cst_35 = arith.constant 1.000000e+00 : f32
      %94 = vector.broadcast %cst_35 : f32 to vector<1x1xf32>
      %95 = arith.divf %94, %93 : vector<1x1xf32>
      %96 = arith.subf %58, %88 : vector<1x1xf32>
      %97 = arith.subf %60, %89 : vector<1x1xf32>
      %98 = vector.broadcast %31 : f32 to vector<1x1xf32>
      %99 = arith.mulf %87, %98 : vector<1x1xf32>
      %100 = arith.mulf %99, %95 : vector<1x1xf32>
      %c0_36 = arith.constant 0 : index
      %c0_37 = arith.constant 0 : index
      %101 = vector.load %arg6[%c0_36, %c0_37] : memref<1x1xf32, #tpu.memory_space<vmem>>, vector<1x1xf32>
      tpu.vector_store %arg6[%c0_36, %c0_37], %91 {strides = array<i32>} : memref<1x1xf32, #tpu.memory_space<vmem>>, vector<1x1xf32>,
      %102 = vector.broadcast %31 : f32 to vector<1x1xf32>
      %103 = arith.mulf %96, %102 : vector<1x1xf32>
      %104 = arith.mulf %103, %95 : vector<1x1xf32>
      %105 = arith.addf %88, %104 : vector<1x1xf32>
      %c0_38 = arith.constant 0 : index
      %c0_39 = arith.constant 0 : index
      %106 = vector.load %arg7[%c0_38, %c0_39] : memref<1x1xf32, #tpu.memory_space<vmem>>, vector<1x1xf32>
      tpu.vector_store %arg7[%c0_38, %c0_39], %105 {strides = array<i32>} : memref<1x1xf32, #tpu.memory_space<vmem>>, vector<1x1xf32>,
      %107 = vector.broadcast %31 : f32 to vector<1x1xf32>
      %108 = arith.mulf %97, %107 : vector<1x1xf32>
      %109 = arith.mulf %108, %95 : vector<1x1xf32>
      %110 = arith.addf %89, %109 : vector<1x1xf32>
      %c0_40 = arith.constant 0 : index
      %c0_41 = arith.constant 0 : index
      %111 = vector.load %arg8[%c0_40, %c0_41] : memref<1x1xf32, #tpu.memory_space<vmem>>, vector<1x1xf32>
      tpu.vector_store %arg8[%c0_40, %c0_41], %110 {strides = array<i32>} : memref<1x1xf32, #tpu.memory_space<vmem>>, vector<1x1xf32>,
      %c0_42 = arith.constant 0 : index
      %c0_43 = arith.constant 0 : index
      %112 = vector.load %arg9[%c0_42, %c0_43] : memref<1x1xf32, #tpu.memory_space<vmem>>, vector<1x1xf32>
      %113 = arith.addf %112, %74 : vector<1x1xf32>
      %114 = arith.mulf %96, %96 : vector<1x1xf32>
      %115 = arith.mulf %114, %100 : vector<1x1xf32>
      %116 = arith.addf %113, %115 : vector<1x1xf32>
      %c0_44 = arith.constant 0 : index
      %c0_45 = arith.constant 0 : index
      %117 = vector.load %arg9[%c0_44, %c0_45] : memref<1x1xf32, #tpu.memory_space<vmem>>, vector<1x1xf32>
      tpu.vector_store %arg9[%c0_44, %c0_45], %116 {strides = array<i32>} : memref<1x1xf32, #tpu.memory_space<vmem>>, vector<1x1xf32>,
      %c0_46 = arith.constant 0 : index
      %c0_47 = arith.constant 0 : index
      %118 = vector.load %arg10[%c0_46, %c0_47] : memref<1x1xf32, #tpu.memory_space<vmem>>, vector<1x1xf32>
      %119 = arith.addf %118, %80 : vector<1x1xf32>
      %120 = arith.mulf %97, %97 : vector<1x1xf32>
      %121 = arith.mulf %120, %100 : vector<1x1xf32>
      %122 = arith.addf %119, %121 : vector<1x1xf32>
      %c0_48 = arith.constant 0 : index
      %c0_49 = arith.constant 0 : index
      %123 = vector.load %arg10[%c0_48, %c0_49] : memref<1x1xf32, #tpu.memory_space<vmem>>, vector<1x1xf32>
      tpu.vector_store %arg10[%c0_48, %c0_49], %122 {strides = array<i32>} : memref<1x1xf32, #tpu.memory_space<vmem>>, vector<1x1xf32>,
      %c0_50 = arith.constant 0 : index
      %c0_51 = arith.constant 0 : index
      %124 = vector.load %arg11[%c0_50, %c0_51] : memref<1x1xf32, #tpu.memory_space<vmem>>, vector<1x1xf32>
      %125 = arith.addf %124, %86 : vector<1x1xf32>
      %126 = arith.mulf %96, %97 : vector<1x1xf32>
      %127 = arith.mulf %126, %100 : vector<1x1xf32>
      %128 = arith.addf %125, %127 : vector<1x1xf32>
      %c0_52 = arith.constant 0 : index
      %c0_53 = arith.constant 0 : index
      %129 = vector.load %arg11[%c0_52, %c0_53] : memref<1x1xf32, #tpu.memory_space<vmem>>, vector<1x1xf32>
      tpu.vector_store %arg11[%c0_52, %c0_53], %128 {strides = array<i32>} : memref<1x1xf32, #tpu.memory_space<vmem>>, vector<1x1xf32>,
      %c0_54 = arith.constant 0 : index
      %c0_55 = arith.constant 0 : index
      %130 = vector.load %arg12[%c0_54, %c0_55] : memref<1x1xf32, #tpu.memory_space<vmem>>, vector<1x1xf32>
      %131 = arith.addf %130, %56 : vector<1x1xf32>
      %c0_56 = arith.constant 0 : index
      %c0_57 = arith.constant 0 : index
      %132 = vector.load %arg12[%c0_56, %c0_57] : memref<1x1xf32, #tpu.memory_space<vmem>>, vector<1x1xf32>
      tpu.vector_store %arg12[%c0_56, %c0_57], %131 {strides = array<i32>} : memref<1x1xf32, #tpu.memory_space<vmem>>, vector<1x1xf32>,
    } else {
    }
    %c0_i32_9 = arith.constant 0 : i32
    %16 = arith.cmpi eq, %arg1, %c0_i32_9 : i32
    %17 = arith.extui %16 : i1 to i32
    %c0_i32_10 = arith.constant 0 : i32
    %18 = arith.cmpi ne, %17, %c0_i32_10 : i32
    scf.if %18 {
      %19 = tpu.iota {dimensions = array<i32: 0>} : vector<8x128xi32>
      %20 = tpu.iota {dimensions = array<i32: 1>} : vector<8x128xi32>
      %cst = arith.constant 0.000000e+00 : f32
      %21 = vector.broadcast %cst : f32 to vector<8x128xf32>
      %c0_i32_11 = arith.constant 0 : i32
      %22 = vector.broadcast %c0_i32_11 : i32 to vector<8x128xi32>
      %23 = arith.cmpi eq, %19, %22 : vector<8x128xi32>
      %c0_i32_12 = arith.constant 0 : i32
      %24 = vector.broadcast %c0_i32_12 : i32 to vector<8x128xi32>
      %25 = arith.cmpi eq, %20, %24 : vector<8x128xi32>
      %26 = arith.andi %23, %25 : vector<8x128xi1>
      %c0_13 = arith.constant 0 : index
      %c0_14 = arith.constant 0 : index
      %27 = vector.load %arg6[%c0_13, %c0_14] : memref<1x1xf32, #tpu.memory_space<vmem>>, vector<1x1xf32>
      %28 = vector.shape_cast %27 : vector<1x1xf32> to vector<1x1xf32>
      %29 = vector.broadcast %28 : vector<1x1xf32> to vector<8x128xf32>
      %30 = arith.select %26, %29, %21 : vector<8x128xi1>, vector<8x128xf32>
      %c0_i32_15 = arith.constant 0 : i32
      %31 = vector.broadcast %c0_i32_15 : i32 to vector<8x128xi32>
      %32 = arith.cmpi eq, %19, %31 : vector<8x128xi32>
      %c1_i32_16 = arith.constant 1 : i32
      %33 = vector.broadcast %c1_i32_16 : i32 to vector<8x128xi32>
      %34 = arith.cmpi eq, %20, %33 : vector<8x128xi32>
      %35 = arith.andi %32, %34 : vector<8x128xi1>
      %c0_17 = arith.constant 0 : index
      %c0_18 = arith.constant 0 : index
      %36 = vector.load %arg7[%c0_17, %c0_18] : memref<1x1xf32, #tpu.memory_space<vmem>>, vector<1x1xf32>
      %37 = vector.shape_cast %36 : vector<1x1xf32> to vector<1x1xf32>
      %38 = vector.broadcast %37 : vector<1x1xf32> to vector<8x128xf32>
      %39 = arith.select %35, %38, %30 : vector<8x128xi1>, vector<8x128xf32>
      %c0_i32_19 = arith.constant 0 : i32
      %40 = vector.broadcast %c0_i32_19 : i32 to vector<8x128xi32>
      %41 = arith.cmpi eq, %19, %40 : vector<8x128xi32>
      %c2_i32 = arith.constant 2 : i32
      %42 = vector.broadcast %c2_i32 : i32 to vector<8x128xi32>
      %43 = arith.cmpi eq, %20, %42 : vector<8x128xi32>
      %44 = arith.andi %41, %43 : vector<8x128xi1>
      %c0_20 = arith.constant 0 : index
      %c0_21 = arith.constant 0 : index
      %45 = vector.load %arg8[%c0_20, %c0_21] : memref<1x1xf32, #tpu.memory_space<vmem>>, vector<1x1xf32>
      %46 = vector.shape_cast %45 : vector<1x1xf32> to vector<1x1xf32>
      %47 = vector.broadcast %46 : vector<1x1xf32> to vector<8x128xf32>
      %48 = arith.select %44, %47, %39 : vector<8x128xi1>, vector<8x128xf32>
      %c0_i32_22 = arith.constant 0 : i32
      %49 = vector.broadcast %c0_i32_22 : i32 to vector<8x128xi32>
      %50 = arith.cmpi eq, %19, %49 : vector<8x128xi32>
      %c3_i32 = arith.constant 3 : i32
      %51 = vector.broadcast %c3_i32 : i32 to vector<8x128xi32>
      %52 = arith.cmpi eq, %20, %51 : vector<8x128xi32>
      %53 = arith.andi %50, %52 : vector<8x128xi1>
      %c0_23 = arith.constant 0 : index
      %c0_24 = arith.constant 0 : index
      %54 = vector.load %arg9[%c0_23, %c0_24] : memref<1x1xf32, #tpu.memory_space<vmem>>, vector<1x1xf32>
      %55 = vector.shape_cast %54 : vector<1x1xf32> to vector<1x1xf32>
      %56 = vector.broadcast %55 : vector<1x1xf32> to vector<8x128xf32>
      %57 = arith.select %53, %56, %48 : vector<8x128xi1>, vector<8x128xf32>
      %c0_i32_25 = arith.constant 0 : i32
      %58 = vector.broadcast %c0_i32_25 : i32 to vector<8x128xi32>
      %59 = arith.cmpi eq, %19, %58 : vector<8x128xi32>
      %c4_i32 = arith.constant 4 : i32
      %60 = vector.broadcast %c4_i32 : i32 to vector<8x128xi32>
      %61 = arith.cmpi eq, %20, %60 : vector<8x128xi32>
      %62 = arith.andi %59, %61 : vector<8x128xi1>
      %c0_26 = arith.constant 0 : index
      %c0_27 = arith.constant 0 : index
      %63 = vector.load %arg10[%c0_26, %c0_27] : memref<1x1xf32, #tpu.memory_space<vmem>>, vector<1x1xf32>
      %64 = vector.shape_cast %63 : vector<1x1xf32> to vector<1x1xf32>
      %65 = vector.broadcast %64 : vector<1x1xf32> to vector<8x128xf32>
      %66 = arith.select %62, %65, %57 : vector<8x128xi1>, vector<8x128xf32>
      %c0_i32_28 = arith.constant 0 : i32
      %67 = vector.broadcast %c0_i32_28 : i32 to vector<8x128xi32>
      %68 = arith.cmpi eq, %19, %67 : vector<8x128xi32>
      %c5_i32 = arith.constant 5 : i32
      %69 = vector.broadcast %c5_i32 : i32 to vector<8x128xi32>
      %70 = arith.cmpi eq, %20, %69 : vector<8x128xi32>
      %71 = arith.andi %68, %70 : vector<8x128xi1>
      %c0_29 = arith.constant 0 : index
      %c0_30 = arith.constant 0 : index
      %72 = vector.load %arg11[%c0_29, %c0_30] : memref<1x1xf32, #tpu.memory_space<vmem>>, vector<1x1xf32>
      %73 = vector.shape_cast %72 : vector<1x1xf32> to vector<1x1xf32>
      %74 = vector.broadcast %73 : vector<1x1xf32> to vector<8x128xf32>
      %75 = arith.select %71, %74, %66 : vector<8x128xi1>, vector<8x128xf32>
      %c0_i32_31 = arith.constant 0 : i32
      %76 = vector.broadcast %c0_i32_31 : i32 to vector<8x128xi32>
      %77 = arith.cmpi eq, %19, %76 : vector<8x128xi32>
      %c6_i32 = arith.constant 6 : i32
      %78 = vector.broadcast %c6_i32 : i32 to vector<8x128xi32>
      %79 = arith.cmpi eq, %20, %78 : vector<8x128xi32>
      %80 = arith.andi %77, %79 : vector<8x128xi1>
      %c0_32 = arith.constant 0 : index
      %c0_33 = arith.constant 0 : index
      %81 = vector.load %arg12[%c0_32, %c0_33] : memref<1x1xf32, #tpu.memory_space<vmem>>, vector<1x1xf32>
      %82 = vector.shape_cast %81 : vector<1x1xf32> to vector<1x1xf32>
      %83 = vector.broadcast %82 : vector<1x1xf32> to vector<8x128xf32>
      %84 = arith.select %80, %83, %75 : vector<8x128xi1>, vector<8x128xf32>
      %c0_34 = arith.constant 0 : index
      %c0_35 = arith.constant 0 : index
      %85 = vector.load %arg5[%c0_34, %c0_35] : memref<8x128xf32, #tpu.memory_space<vmem>>, vector<8x128xf32>
      tpu.vector_store %arg5[%c0_34, %c0_35], %84 {strides = array<i32>} : memref<8x128xf32, #tpu.memory_space<vmem>>, vector<8x128xf32>,
    } else {
    }
    return
  }
  func.func @transform_0(%arg0: i32, %arg1: i32) -> (i32, i32) {
    %c1_i32 = arith.constant 1 : i32
    %0 = arith.muli %arg0, %c1_i32 : i32
    %1 = arith.addi %0, %arg1 : i32
    %c0_i32 = arith.constant 0 : i32
    %2 = arith.minsi %1, %c0_i32 : i32
    %c0_i32_0 = arith.constant 0 : i32
    %c0_i32_1 = arith.constant 0 : i32
    return %2, %c0_i32_0 : i32, i32
  }
  func.func @transform_1(%arg0: i32, %arg1: i32) -> (i32, i32) {
    %c1_i32 = arith.constant 1 : i32
    %0 = arith.muli %arg0, %c1_i32 : i32
    %1 = arith.addi %0, %arg1 : i32
    %c0_i32 = arith.constant 0 : i32
    %2 = arith.minsi %1, %c0_i32 : i32
    %c0_i32_0 = arith.constant 0 : i32
    %c0_i32_1 = arith.constant 0 : i32
    return %2, %c0_i32_0 : i32, i32
  }
  func.func @transform_2(%arg0: i32, %arg1: i32) -> (i32, i32) {
    %c1_i32 = arith.constant 1 : i32
    %0 = arith.muli %arg0, %c1_i32 : i32
    %1 = arith.addi %0, %arg1 : i32
    %c0_i32 = arith.constant 0 : i32
    %2 = arith.minsi %1, %c0_i32 : i32
    %c0_i32_0 = arith.constant 0 : i32
    %c0_i32_1 = arith.constant 0 : i32
    return %2, %c0_i32_0 : i32, i32
  }
  func.func @transform_3(%arg0: i32, %arg1: i32) -> (i32, i32) {
    %c0_i32 = arith.constant 0 : i32
    %c0_i32_0 = arith.constant 0 : i32
    return %arg0, %c0_i32 : i32, i32
  }
}

</mosaic_0001>

<llo_original>
// kernel: tpu_custom_call.1
$region0: #{tpu_custom_call.1}
  #allocation0 [shape = 'u32[]', space=smem, size = 0x4, offset = 0x4, fixed_abs, tag = 'smem constant byte address 0x4 - core index']
  #allocation1 [shape = 'u32[72,128]{1,0:T(1,128)}', space=vmem, size = 0x9000, scoped, tag = 'internal scratch']
  #allocation2 [shape = 'f32[1,1]{1,0:T(1,128)}', space=vmem, size = 0x200, scoped, tag = 'scratch operand']
  #allocation3 [shape = 'f32[1,1]{1,0:T(1,128)}', space=vmem, size = 0x200, scoped, tag = 'scratch operand']
  #allocation4 [shape = 'f32[1,1]{1,0:T(1,128)}', space=vmem, size = 0x200, scoped, tag = 'scratch operand']
  #allocation5 [shape = 'f32[1,1]{1,0:T(1,128)}', space=vmem, size = 0x200, scoped, tag = 'scratch operand']
  #allocation6 [shape = 'f32[1,1]{1,0:T(1,128)}', space=vmem, size = 0x200, scoped, tag = 'scratch operand']
  #allocation7 [shape = 'f32[1,1]{1,0:T(1,128)}', space=vmem, size = 0x200, scoped, tag = 'scratch operand']
  #allocation8 [shape = 'f32[1,1]{1,0:T(1,128)}', space=vmem, size = 0x200, scoped, tag = 'scratch operand']
  %s0 = inlined_call_operand.hbm [shape: f32[1,128], index: 0, kind: input, shape index: {}]
  %s1 = inlined_call_operand.hbm [shape: f32[1,128], index: 1, kind: input, shape index: {}]
  %s2 = inlined_call_operand.vmem [shape: f32[1,128], index: 2, kind: input, shape index: {}]
  %s3 = inlined_call_operand.hbm [shape: f32[8,128], index: 3, kind: output, shape index: {}]
  %s4 = sld [smem:[#allocation0]]
  $region46: #{tpu_custom_call.1} parent=0
    _
  %s6 = ssub.s32 1, %s4
  %s7 = scalar_select 0, %s6, %s4
  $region1: #{tpu_custom_call.1} parent=0
    #allocation9 [shape = 'u8[512]{0}', space=vmem, size = 0x400, scoped, tag = 'input window, operand 0, single buffered']
    #allocation10 [shape = 's32[1]{0}', space=sflag, size = 0x4, scoped, tag = 'scoped memory for tpu_custom_call.1']
    #allocation11 [shape = 's32[1]{0}', space=sflag, size = 0x4, scoped, tag = 'scoped memory for tpu_custom_call.1']
    #allocation12 [shape = 'u8[512]{0}', space=vmem, size = 0x400, scoped, tag = 'input window, operand 1, single buffered']
    #allocation13 [shape = 's32[1]{0}', space=sflag, size = 0x4, scoped, tag = 'scoped memory for tpu_custom_call.1']
    #allocation14 [shape = 'u8[4096]{0}', space=vmem, size = 0x1000, scoped, tag = 'output window, operand 0, single buffered']
    %8 = vsyncpa [#allocation10], 0
    %9 = vsyncpa [#allocation13], 0
    %10 = vsyncpa [#allocation11], 0
    // Predicated region
    $region2: #{tpu_custom_call.1} parent=1 // pred_check
      _
    $region3: #{tpu_custom_call.1} parent=1 // pred_check_branch
      %12 = sbr.rel (0) target = $region5
    $region4: #{tpu_custom_call.1} parent=1 // pred_region
      %s13 = sadd.s32 0, 0
      %p14 = scmp.lt.s32.totalorder %s13, 0
      %s15 = scalar_select %p14, %s13, 0
      %17 = vsyncadd [#allocation10], 0
      %s18 = scalar_lea.hbm %s0, %s15
      %s20 = sshll.u32 %s18, 4
      %s21 = int_to_ptr.hbm [resolvable:$true] %s20
      %s22 = sshll.u32 [#allocation9], 4
      %s23 = int_to_ptr.vmem [resolvable:$true] %s22
      %25 = dma.hbm_to_vmem [thread:$0]  %s21, 16, %s23, [#allocation10]
    $region5: #{tpu_custom_call.1} parent=1 // pred_fallthru
      _
    // Predicated region
    $region6: #{tpu_custom_call.1} parent=1 // pred_check
      _
    $region7: #{tpu_custom_call.1} parent=1 // pred_check_branch
      %27 = sbr.rel (0) target = $region9
    $region8: #{tpu_custom_call.1} parent=1 // pred_region
      %s28 = sadd.s32 0, 0
      %p29 = scmp.lt.s32.totalorder %s28, 0
      %s30 = scalar_select %p29, %s28, 0
      %32 = vsyncadd [#allocation13], 0
      %s33 = scalar_lea.hbm %s1, %s30
      %s35 = sshll.u32 %s33, 4
      %s36 = int_to_ptr.hbm [resolvable:$true] %s35
      %s37 = sshll.u32 [#allocation12], 4
      %s38 = int_to_ptr.vmem [resolvable:$true] %s37
      %40 = dma.hbm_to_vmem [thread:$0]  %s36, 16, %s38, [#allocation13]
    $region9: #{tpu_custom_call.1} parent=1 // pred_fallthru
      _
    // Predicated region
    $region10: #{tpu_custom_call.1} parent=1 // pred_check
      _
    $region11: #{tpu_custom_call.1} parent=1 // pred_check_branch
      %42 = sbr.rel (0) target = $region13
    $region12: #{tpu_custom_call.1} parent=1 // pred_region
      %s43 = sadd.s32 0, 0
      %p44 = scmp.lt.s32.totalorder %s43, 0
      %s45 = scalar_select %p44, %s43, 0
      %p46 = scmp.lt.s32.totalorder %s45, 0
      %s47 = scalar_select %p46, %s45, 0
      %s48 = scalar_lea.vmem %s2, %s47
      %s49 = sadd.s32 0, 0
      %p50 = scmp.lt.s32.totalorder %s49, 0
      %s51 = scalar_select %p50, %s49, 0
    $region13: #{tpu_custom_call.1} parent=1 // pred_fallthru
      _
    // Predicated region
    $region14: #{tpu_custom_call.1} parent=1 // pred_check
      _
    $region15: #{tpu_custom_call.1} parent=1 // pred_check_branch
      %53 = sbr.rel (0) target = $region17
    $region16: #{tpu_custom_call.1} parent=1 // pred_region
      %55 = dma.done [#allocation10], 16
    $region17: #{tpu_custom_call.1} parent=1 // pred_fallthru
      _
    // Predicated region
    $region18: #{tpu_custom_call.1} parent=1 // pred_check
      _
    $region19: #{tpu_custom_call.1} parent=1 // pred_check_branch
      %57 = sbr.rel (0) target = $region21
    $region20: #{tpu_custom_call.1} parent=1 // pred_region
      %59 = dma.done [#allocation13], 16
    $region21: #{tpu_custom_call.1} parent=1 // pred_fallthru
      _
    %s60 = sadd.s32 0, 0
    %p61 = scmp.lt.s32.totalorder %s60, 0
    %s62 = scalar_select %p61, %s60, 0
    %p63 = scmp.lt.s32.totalorder %s62, 0
    %s64 = scalar_select %p63, %s62, 0
    %s65 = scalar_lea.vmem %s2, %s64
    %s66 = sadd.s32 0, 0
    %p67 = scmp.lt.s32.totalorder %s66, 0
    %s68 = scalar_select %p67, %s66, 0
    %s69 = sadd.s32 0, 0
    %p70 = scmp.lt.s32.totalorder %s69, 0
    %s71 = scalar_select %p70, %s69, 0
    %s72 = sadd.s32 0, 0
    %p73 = scmp.lt.s32.totalorder %s72, 0
    %s74 = scalar_select %p73, %s72, 0
    %p75 = scmp.lt.s32.totalorder %s74, 0
    %s76 = scalar_select %p75, %s74, 0
    %s77 = scalar_lea.vmem %s2, %s76
    %s78 = sadd.s32 0, 0
    %p79 = scmp.lt.s32.totalorder %s78, 0
    %s80 = scalar_select %p79, %s78, 0
    %p81 = scmp.eq.s32.totalorder 0, 0
    // Predicated region
    $region22: #{tpu_custom_call.1} parent=1 // pred_check
      %p82 = pneg %p81
    $region23: #{tpu_custom_call.1} parent=1 // pred_check_branch
      %84 = sbr.rel (%p82) target = $region25
    $region24: #{tpu_custom_call.1} parent=1 // pred_region
      %vm85 = vcmask 0
      %86 = vst.msk [vmem:[#allocation2] sm:$0x1] %vm85, 0.0
      %87 = vst.msk [vmem:[#allocation3] sm:$0x1] %vm85, 0.0
      %88 = vst.msk [vmem:[#allocation4] sm:$0x1] %vm85, 0.0
      %89 = vst.msk [vmem:[#allocation5] sm:$0x1] %vm85, 0.0
      %90 = vst.msk [vmem:[#allocation6] sm:$0x1] %vm85, 0.0
      %91 = vst.msk [vmem:[#allocation7] sm:$0x1] %vm85, 0.0
      %92 = vst.msk [vmem:[#allocation8] sm:$0x1] %vm85, 0.0
    $region25: #{tpu_custom_call.1} parent=1 // pred_fallthru
      _
    %v93 = vld [vmem:[#allocation9] sm:$0x1]
    %v94 = vld [vmem:[#allocation12] sm:$0x1]
    %v95 = vld [vmem:[%s77] sm:$0x1]
    %s96 = sadd.s32 0, 0
    %s97 = smul.u32 %s96, 128
    %s98 = sadd.s32 %s97, 128
    %p99 = scmp.le.s32.totalorder %s98, 8
    // Predicated region
    $region26: #{tpu_custom_call.1} parent=1 // pred_check
      %p100 = pneg %p99
    $region27: #{tpu_custom_call.1} parent=1 // pred_check_branch
      %102 = sbr.rel (%p100) target = $region29
    $region28: #{tpu_custom_call.1} parent=1 // pred_region
      %vm103 = vcmask 1040384
      %v104 = vsel %vm103, %v93, 0.0
      %105 = vadd.xlane.f32.xlu0 %v104
      %v106 = vpop.xlane.xlu0 %105
      %v107 = vrot.slane %v106, 4
      %v108 = vadd.f32 %v106, %v107
      %v109 = vrot.slane %v108, 2
      %v110 = vadd.f32 %v108, %v109
      %v111 = vrot.slane %v110, 1
      %v112 = vadd.f32 %v110, %v111
      %s113 = vtos %v112
      %v114 = vstv %s113
      %v115 = vsel %vm103, %v95, 0.0
      %116 = vadd.xlane.f32.xlu0 %v115
      %v117 = vpop.xlane.xlu0 %116
      %v118 = vrot.slane %v117, 4
      %v119 = vadd.f32 %v117, %v118
      %v120 = vrot.slane %v119, 2
      %v121 = vadd.f32 %v119, %v120
      %v122 = vrot.slane %v121, 1
      %v123 = vadd.f32 %v121, %v122
      %s124 = vtos %v123
      %v125 = vstv %s124
      %v126 = vsub.f32 %v94, %v95
      %v127 = vand.u32 2147483647, %v126
      %v128 = vsel %vm103, %v127, 0.0
      %129 = vadd.xlane.f32.xlu0 %v128
      %v130 = vpop.xlane.xlu0 %129
      %v131 = vrot.slane %v130, 4
      %v132 = vadd.f32 %v130, %v131
      %v133 = vrot.slane %v132, 2
      %v134 = vadd.f32 %v132, %v133
      %v135 = vrot.slane %v134, 1
      %v136 = vadd.f32 %v134, %v135
      %s137 = vtos %v136
      %v138 = vstv %s137
      %v139 = vmul.f32 %v114, 0.0078125
      %v140 = vmul.f32 %v125, 0.0078125
      %v141 = vsub.f32 %v93, %v139
      %v142 = vsub.f32 %v95, %v140
      %v143 = vmul.f32 %v141, %v141
      %v144 = vsel %vm103, %v143, 0.0
      %145 = vadd.xlane.f32.xlu0 %v144
      %v146 = vpop.xlane.xlu0 %145
      %v147 = vrot.slane %v146, 4
      %v148 = vadd.f32 %v146, %v147
      %v149 = vrot.slane %v148, 2
      %v150 = vadd.f32 %v148, %v149
      %v151 = vrot.slane %v150, 1
      %v152 = vadd.f32 %v150, %v151
      %s153 = vtos %v152
      %v154 = vstv %s153
      %v155 = vmul.f32 %v142, %v142
      %v156 = vsel %vm103, %v155, 0.0
      %157 = vadd.xlane.f32.xlu0 %v156
      %v158 = vpop.xlane.xlu0 %157
      %v159 = vrot.slane %v158, 4
      %v160 = vadd.f32 %v158, %v159
      %v161 = vrot.slane %v160, 2
      %v162 = vadd.f32 %v160, %v161
      %v163 = vrot.slane %v162, 1
      %v164 = vadd.f32 %v162, %v163
      %s165 = vtos %v164
      %v166 = vstv %s165
      %v167 = vmul.f32 %v141, %v142
      %v168 = vsel %vm103, %v167, 0.0
      %169 = vadd.xlane.f32.xlu0 %v168
      %v170 = vpop.xlane.xlu0 %169
      %v171 = vrot.slane %v170, 4
      %v172 = vadd.f32 %v170, %v171
      %v173 = vrot.slane %v172, 2
      %v174 = vadd.f32 %v172, %v173
      %v175 = vrot.slane %v174, 1
      %v176 = vadd.f32 %v174, %v175
      %s177 = vtos %v176
      %v178 = vstv %s177
      %v179 = vld [vmem:[#allocation2] sm:$0x1]
      %v180 = vld [vmem:[#allocation3] sm:$0x1]
      %v181 = vld [vmem:[#allocation4] sm:$0x1]
      %v182 = vadd.f32 %v179, 128.0
      %v183 = vmax.f32 %v182, 1.0
      %v184 = vrcp.pop %v183
      %v185 = vmul.f32 %v183, %v184
      %v186 = vsub.f32 1.0, %v185
      %v187 = vmul.f32 %v184, %v186
      %v188 = vadd.f32 %v184, %v187
      %vm189 = vweird.f32 %v183
      %vm190 = vweird.f32 %v184
      %vm191 = vmor %vm189, %vm190
      %v192 = vsel %vm191, %v184, %v188
      %v193 = vand.u32 2147483647, %v183
      %vm194 = vcmp.eq.f32.partialorder %v193, 8.507059e+37
      %v195 = vand.u32 %v183, 2147483648
      %v196 = vor.u32 1.1754944e-38, %v195
      %v197 = vsel %vm194, %v196, %v192
      %v198 = vmul.f32 1.0, %v197
      %v199 = vsub.f32 %v139, %v180
      %v200 = vsub.f32 %v140, %v181
      %v201 = vmul.f32 %v179, 128.0
      %v202 = vmul.f32 %v201, %v198
      %vm203 = vcmask 0
      %204 = vst.msk [vmem:[#allocation2] sm:$0x1] %vm203, %v182
      %v205 = vmul.f32 %v199, 128.0
      %v206 = vmul.f32 %v205, %v198
      %v207 = vadd.f32 %v180, %v206
      %208 = vst.msk [vmem:[#allocation3] sm:$0x1] %vm203, %v207
      %v209 = vmul.f32 %v200, 128.0
      %v210 = vmul.f32 %v209, %v198
      %v211 = vadd.f32 %v181, %v210
      %212 = vst.msk [vmem:[#allocation4] sm:$0x1] %vm203, %v211
      %v213 = vld [vmem:[#allocation5] sm:$0x1]
      %v214 = vadd.f32 %v213, %v154
      %v215 = vmul.f32 %v199, %v199
      %v216 = vmul.f32 %v215, %v202
      %v217 = vadd.f32 %v214, %v216
      %218 = vst.msk [vmem:[#allocation5] sm:$0x1] %vm203, %v217
      %v219 = vld [vmem:[#allocation6] sm:$0x1]
      %v220 = vadd.f32 %v219, %v166
      %v221 = vmul.f32 %v200, %v200
      %v222 = vmul.f32 %v221, %v202
      %v223 = vadd.f32 %v220, %v222
      %224 = vst.msk [vmem:[#allocation6] sm:$0x1] %vm203, %v223
      %v225 = vld [vmem:[#allocation7] sm:$0x1]
      %v226 = vadd.f32 %v225, %v178
      %v227 = vmul.f32 %v199, %v200
      %v228 = vmul.f32 %v227, %v202
      %v229 = vadd.f32 %v226, %v228
      %230 = vst.msk [vmem:[#allocation7] sm:$0x1] %vm203, %v229
      %v231 = vld [vmem:[#allocation8] sm:$0x1]
      %v232 = vadd.f32 %v231, %v138
      %233 = vst.msk [vmem:[#allocation8] sm:$0x1] %vm203, %v232
    $region29: #{tpu_custom_call.1} parent=1 // pred_fallthru
      _
    %p234 = scmp.gt.s32.totalorder %s98, 8
    // Predicated region
    $region30: #{tpu_custom_call.1} parent=1 // pred_check
      %p235 = pneg %p234
    $region31: #{tpu_custom_call.1} parent=1 // pred_check_branch
      %237 = sbr.rel (%p235) target = $region33
    $region32: #{tpu_custom_call.1} parent=1 // pred_region
      %v238 = vlaneseq
      %v239 = vshrl.u32 %v238, 7
      %v240 = vmul.u32 %v239, 128
      %v241 = vstv %s97
      %v242 = vadd.s32 %v241, %v240
      %v243 = vlaneseq
      %v244 = vand.u32 %v243, 127
      %v245 = vadd.s32 %v242, %v244
      %vm246 = vcmp.lt.s32.totalorder %v245, 8
      %s247 = ssub.s32 8, %s97
      %p248 = scmp.gt.s32.totalorder %s247, 0
      %s249 = scalar_select %p248, %s247, 0
      %p250 = scmp.lt.s32.totalorder %s249, 128
      %s251 = scalar_select %p250, %s249, 128
      %s252 = scvt.s32.f32 %s251
      %s253 = smax.f32 %s252, 1.0
      %v254 = vstv %s253
      %v255 = vrcp.pop %v254
      %v256 = vmul.f32 %v254, %v255
      %v257 = vsub.f32 1.0, %v256
      %v258 = vmul.f32 %v255, %v257
      %v259 = vadd.f32 %v255, %v258
      %vm260 = vweird.f32 %v254
      %vm261 = vweird.f32 %v255
      %vm262 = vmor %vm260, %vm261
      %v263 = vsel %vm262, %v255, %v259
      %v264 = vand.u32 2147483647, %v254
      %vm265 = vcmp.eq.f32.partialorder %v264, 8.507059e+37
      %v266 = vand.u32 %v254, 2147483648
      %v267 = vor.u32 1.1754944e-38, %v266
      %v268 = vsel %vm265, %v267, %v263
      %s269 = vtos %v268
      %v270 = vsel %vm246, %v93, 0.0
      %vm271 = vcmask 1040384
      %v272 = vsel %vm271, %v270, 0.0
      %273 = vadd.xlane.f32.xlu0 %v272
      %v274 = vpop.xlane.xlu0 %273
      %v275 = vrot.slane %v274, 4
      %v276 = vadd.f32 %v274, %v275
      %v277 = vrot.slane %v276, 2
      %v278 = vadd.f32 %v276, %v277
      %v279 = vrot.slane %v278, 1
      %v280 = vadd.f32 %v278, %v279
      %s281 = vtos %v280
      %v282 = vstv %s281
      %v283 = vsel %vm246, %v95, 0.0
      %v284 = vsel %vm271, %v283, 0.0
      %285 = vadd.xlane.f32.xlu0 %v284
      %v286 = vpop.xlane.xlu0 %285
      %v287 = vrot.slane %v286, 4
      %v288 = vadd.f32 %v286, %v287
      %v289 = vrot.slane %v288, 2
      %v290 = vadd.f32 %v288, %v289
      %v291 = vrot.slane %v290, 1
      %v292 = vadd.f32 %v290, %v291
      %s293 = vtos %v292
      %v294 = vstv %s293
      %v295 = vsub.f32 %v94, %v95
      %v296 = vand.u32 2147483647, %v295
      %v297 = vsel %vm246, %v296, 0.0
      %v298 = vsel %vm271, %v297, 0.0
      %299 = vadd.xlane.f32.xlu0 %v298
      %v300 = vpop.xlane.xlu0 %299
      %v301 = vrot.slane %v300, 4
      %v302 = vadd.f32 %v300, %v301
      %v303 = vrot.slane %v302, 2
      %v304 = vadd.f32 %v302, %v303
      %v305 = vrot.slane %v304, 1
      %v306 = vadd.f32 %v304, %v305
      %s307 = vtos %v306
      %v308 = vstv %s307
      %v309 = vstv %s269
      %v310 = vmul.f32 %v282, %v309
      %v311 = vmul.f32 %v294, %v309
      %v312 = vsub.f32 %v93, %v310
      %v313 = vsel %vm246, %v312, 0.0
      %v314 = vsub.f32 %v95, %v311
      %v315 = vsel %vm246, %v314, 0.0
      %v316 = vmul.f32 %v313, %v313
      %v317 = vsel %vm271, %v316, 0.0
      %318 = vadd.xlane.f32.xlu0 %v317
      %v319 = vpop.xlane.xlu0 %318
      %v320 = vrot.slane %v319, 4
      %v321 = vadd.f32 %v319, %v320
      %v322 = vrot.slane %v321, 2
      %v323 = vadd.f32 %v321, %v322
      %v324 = vrot.slane %v323, 1
      %v325 = vadd.f32 %v323, %v324
      %s326 = vtos %v325
      %v327 = vstv %s326
      %v328 = vmul.f32 %v315, %v315
      %v329 = vsel %vm271, %v328, 0.0
      %330 = vadd.xlane.f32.xlu0 %v329
      %v331 = vpop.xlane.xlu0 %330
      %v332 = vrot.slane %v331, 4
      %v333 = vadd.f32 %v331, %v332
      %v334 = vrot.slane %v333, 2
      %v335 = vadd.f32 %v333, %v334
      %v336 = vrot.slane %v335, 1
      %v337 = vadd.f32 %v335, %v336
      %s338 = vtos %v337
      %v339 = vstv %s338
      %v340 = vmul.f32 %v313, %v315
      %v341 = vsel %vm271, %v340, 0.0
      %342 = vadd.xlane.f32.xlu0 %v341
      %v343 = vpop.xlane.xlu0 %342
      %v344 = vrot.slane %v343, 4
      %v345 = vadd.f32 %v343, %v344
      %v346 = vrot.slane %v345, 2
      %v347 = vadd.f32 %v345, %v346
      %v348 = vrot.slane %v347, 1
      %v349 = vadd.f32 %v347, %v348
      %s350 = vtos %v349
      %v351 = vstv %s350
      %v352 = vld [vmem:[#allocation2] sm:$0x1]
      %v353 = vld [vmem:[#allocation3] sm:$0x1]
      %v354 = vld [vmem:[#allocation4] sm:$0x1]
      %v355 = vstv %s252
      %v356 = vadd.f32 %v352, %v355
      %v357 = vmax.f32 %v356, 1.0
      %v358 = vrcp.pop %v357
      %v359 = vmul.f32 %v357, %v358
      %v360 = vsub.f32 1.0, %v359
      %v361 = vmul.f32 %v358, %v360
      %v362 = vadd.f32 %v358, %v361
      %vm363 = vweird.f32 %v357
      %vm364 = vweird.f32 %v358
      %vm365 = vmor %vm363, %vm364
      %v366 = vsel %vm365, %v358, %v362
      %v367 = vand.u32 2147483647, %v357
      %vm368 = vcmp.eq.f32.partialorder %v367, 8.507059e+37
      %v369 = vand.u32 %v357, 2147483648
      %v370 = vor.u32 1.1754944e-38, %v369
      %v371 = vsel %vm368, %v370, %v366
      %v372 = vmul.f32 1.0, %v371
      %v373 = vsub.f32 %v310, %v353
      %v374 = vsub.f32 %v311, %v354
      %v375 = vmul.f32 %v352, %v355
      %v376 = vmul.f32 %v375, %v372
      %vm377 = vcmask 0
      %378 = vst.msk [vmem:[#allocation2] sm:$0x1] %vm377, %v356
      %v379 = vmul.f32 %v373, %v355
      %v380 = vmul.f32 %v379, %v372
      %v381 = vadd.f32 %v353, %v380
      %382 = vst.msk [vmem:[#allocation3] sm:$0x1] %vm377, %v381
      %v383 = vmul.f32 %v374, %v355
      %v384 = vmul.f32 %v383, %v372
      %v385 = vadd.f32 %v354, %v384
      %386 = vst.msk [vmem:[#allocation4] sm:$0x1] %vm377, %v385
      %v387 = vld [vmem:[#allocation5] sm:$0x1]
      %v388 = vadd.f32 %v387, %v327
      %v389 = vmul.f32 %v373, %v373
      %v390 = vmul.f32 %v389, %v376
      %v391 = vadd.f32 %v388, %v390
      %392 = vst.msk [vmem:[#allocation5] sm:$0x1] %vm377, %v391
      %v393 = vld [vmem:[#allocation6] sm:$0x1]
      %v394 = vadd.f32 %v393, %v339
      %v395 = vmul.f32 %v374, %v374
      %v396 = vmul.f32 %v395, %v376
      %v397 = vadd.f32 %v394, %v396
      %398 = vst.msk [vmem:[#allocation6] sm:$0x1] %vm377, %v397
      %v399 = vld [vmem:[#allocation7] sm:$0x1]
      %v400 = vadd.f32 %v399, %v351
      %v401 = vmul.f32 %v373, %v374
      %v402 = vmul.f32 %v401, %v376
      %v403 = vadd.f32 %v400, %v402
      %404 = vst.msk [vmem:[#allocation7] sm:$0x1] %vm377, %v403
      %v405 = vld [vmem:[#allocation8] sm:$0x1]
      %v406 = vadd.f32 %v405, %v308
      %407 = vst.msk [vmem:[#allocation8] sm:$0x1] %vm377, %v406
    $region33: #{tpu_custom_call.1} parent=1 // pred_fallthru
      _
    // Predicated region
    $region34: #{tpu_custom_call.1} parent=1 // pred_check
      %p408 = pneg %p81
    $region35: #{tpu_custom_call.1} parent=1 // pred_check_branch
      %410 = sbr.rel (%p408) target = $region37
    $region36: #{tpu_custom_call.1} parent=1 // pred_region
      %v411 = vlaneseq
      %v412 = vshrl.u32 %v411, 7
      %v413 = vlaneseq
      %v414 = vand.u32 %v413, 127
      %vm415 = vcmp.eq.s32.totalorder %v412, 0
      %vm416 = vcmp.eq.s32.totalorder %v414, 0
      %vm417 = vmand %vm415, %vm416
      %v418 = vld [vmem:[#allocation2] sm:$0x1]
      %v420 = vperm.slane %v418, 0
      %421 = vset.pattern.permute.xlu0 0
      %422 = vperm.xlu0 %421, %v420
      %v423 = vpop.permute.xlu0 %422
      %v425 = vsel %vm417, %v423, 0.0
      %vm426 = vcmp.eq.s32.totalorder %v414, 1
      %vm427 = vmand %vm415, %vm426
      %v428 = vld [vmem:[#allocation3] sm:$0x1]
      %v430 = vperm.slane %v428, 0
      %431 = vset.pattern.permute.xlu0 0
      %432 = vperm.xlu0 %431, %v430
      %v433 = vpop.permute.xlu0 %432
      %v435 = vsel %vm427, %v433, %v425
      %vm436 = vcmp.eq.s32.totalorder %v414, 2
      %vm437 = vmand %vm415, %vm436
      %v438 = vld [vmem:[#allocation4] sm:$0x1]
      %v440 = vperm.slane %v438, 0
      %441 = vset.pattern.permute.xlu0 0
      %442 = vperm.xlu0 %441, %v440
      %v443 = vpop.permute.xlu0 %442
      %v445 = vsel %vm437, %v443, %v435
      %vm446 = vcmp.eq.s32.totalorder %v414, 3
      %vm447 = vmand %vm415, %vm446
      %v448 = vld [vmem:[#allocation5] sm:$0x1]
      %v450 = vperm.slane %v448, 0
      %451 = vset.pattern.permute.xlu0 0
      %452 = vperm.xlu0 %451, %v450
      %v453 = vpop.permute.xlu0 %452
      %v455 = vsel %vm447, %v453, %v445
      %vm456 = vcmp.eq.s32.totalorder %v414, 4
      %vm457 = vmand %vm415, %vm456
      %v458 = vld [vmem:[#allocation6] sm:$0x1]
      %v460 = vperm.slane %v458, 0
      %461 = vset.pattern.permute.xlu0 0
      %462 = vperm.xlu0 %461, %v460
      %v463 = vpop.permute.xlu0 %462
      %v465 = vsel %vm457, %v463, %v455
      %vm466 = vcmp.eq.s32.totalorder %v414, 5
      %vm467 = vmand %vm415, %vm466
      %v468 = vld [vmem:[#allocation7] sm:$0x1]
      %v470 = vperm.slane %v468, 0
      %471 = vset.pattern.permute.xlu0 0
      %472 = vperm.xlu0 %471, %v470
      %v473 = vpop.permute.xlu0 %472
      %v475 = vsel %vm467, %v473, %v465
      %vm476 = vcmp.eq.s32.totalorder %v414, 6
      %vm477 = vmand %vm415, %vm476
      %v478 = vld [vmem:[#allocation8] sm:$0x1]
      %v480 = vperm.slane %v478, 0
      %481 = vset.pattern.permute.xlu0 0
      %482 = vperm.xlu0 %481, %v480
      %v483 = vpop.permute.xlu0 %482
      %v485 = vsel %vm477, %v483, %v475
      %486 = vst [vmem:[#allocation14] sm:$0xff] %v485
    $region37: #{tpu_custom_call.1} parent=1 // pred_fallthru
      _
    // Predicated region
    $region38: #{tpu_custom_call.1} parent=1 // pred_check
      _
    $region39: #{tpu_custom_call.1} parent=1 // pred_check_branch
      %488 = sbr.rel (0) target = $region41
    $region40: #{tpu_custom_call.1} parent=1 // pred_region
      %490 = vsyncadd [#allocation11], 0
      %s492 = sshll.u32 [#allocation14], 4
      %s493 = int_to_ptr.vmem [resolvable:$true] %s492
      %s494 = sshll.u32 %s3, 4
      %s495 = int_to_ptr.hbm [resolvable:$true] %s494
      %497 = dma.vmem_to_hbm [thread:$0]  %s493, 128, %s495, [#allocation11]
    $region41: #{tpu_custom_call.1} parent=1 // pred_fallthru
      _
    // Predicated region
    $region42: #{tpu_custom_call.1} parent=1 // pred_check
      _
    $region43: #{tpu_custom_call.1} parent=1 // pred_check_branch
      %499 = sbr.rel (0) target = $region45
    $region44: #{tpu_custom_call.1} parent=1 // pred_region
      %501 = dma.done [#allocation11], 128
    $region45: #{tpu_custom_call.1} parent=1 // pred_fallthru
      _
    %502 = vsyncpa [#allocation10], 1
    %503 = vsyncpa [#allocation13], 1
    %504 = vsyncpa [#allocation11], 1

</llo_original>
